<compile_context>
chip_gen: v5e
topology: v5e:2x2
jax: 0.10.0
libtpu: 0.0.40
codegen_flags: <defaults>
</compile_context>

<pallas_src>
import jax
import jax.numpy as jnp
from jax.experimental import pallas as pl
from jax.experimental.pallas import tpu as pltpu


def _round_up(x, m):
    return ((x + m - 1) // m) * m


def lsh_kernel(x_ref, wt_ref, v_ref):
    # x_ref:  (TM, E)  streamed input tile (f32 or bf16)
    # wt_ref: (E, D)   resident pre-transposed weights (f32)
    # v_ref:  (TM, D)  int32 output tile (masked store when D < 128 / partial B)
    acc = jnp.dot(x_ref[...], wt_ref[...], preferred_element_type=jnp.float32)
    # 'trunc' activation + .int(): f32 -> int32 conversion truncates toward 0.
    v_ref[...] = acc.astype(jnp.int32)


def lsh_forward(x, weights, *, block_b=4096):
    """Pallas equivalent of LSH.forward(x, return_index=True) (eval path).

    x:       (B, E)   input batch (f32 or bf16)
    weights: (D, E)   LSH projection weights (PyTorch layout)
    returns: (B, D)   int32 hash indices
    """
    B, E = x.shape
    D, E2 = weights.shape
    assert E == E2

    # Keep the big streamed operand in its native MXU-friendly dtype: no extra
    # wrapper-side HBM cast pass for f32 / bf16 inputs.
    if x.dtype not in (jnp.float32, jnp.bfloat16):
        x = x.astype(jnp.float32)
    # Weights are tiny (D x E); one-off transpose/cast in the wrapper is noise.
    wt = weights.astype(jnp.float32).T          # (E, D), resident in VMEM

    # Batch tile: sublane-aligned and large enough to amortize the ~0.35 us
    # per-grid-step overhead.  No B/E/D padding and no post-call slicing:
    # out_shape is the true (B, D), so the partial last block's stores are
    # masked, and since E is carried whole per block the junk rows of a
    # partial input block only feed masked-out output rows.
    TM = min(block_b, _round_up(B, 8))
    if B > 8 and pl.cdiv(B, TM) < 2:
        # v7x: ensure >= 2 grid steps so both TensorCores get work on the
        # "parallel" batch axis.
        TM = _round_up(pl.cdiv(B, 2), 8)
    grid = (pl.cdiv(B, TM),)

    cost = pl.CostEstimate(
        flops=2 * B * D * E,
        transcendentals=0,
        bytes_accessed=B * E * x.dtype.itemsize + E * D * 4 + B * D * 4,
    )

    return pl.pallas_call(
        lsh_kernel,
        out_shape=jax.ShapeDtypeStruct((B, D), jnp.int32),
        grid=grid,
        in_specs=[
            # Streamed batch tiles; last dim = full E (no K padding / inflation).
            pl.BlockSpec((TM, E), lambda i: (i, 0)),
            # Whole weight matrix, same block every step -> DMA'd once, resident.
            # TODO(synk): for a generic large-D/large-E configuration, add a
            # second ("arbitrary") grid axis tiling D so the resident weight
            # block fits v5e's 16 MiB / v7x's 32 MiB scoped VMEM.
            pl.BlockSpec((E, D), lambda i: (0, 0)),
        ],
        out_specs=pl.BlockSpec((TM, D), lambda i: (i, 0)),
        compiler_params=pltpu.CompilerParams(
            dimension_semantics=("parallel",),
        ),
        cost_estimate=cost,
    )(x, wt)


if __name__ == "__main__":
    # Module hyper-params (small, consistent with __init__): embed_dim, num_dim, width.
    batch = 8
    embed_dim = 32
    num_dim = 4
    width = 1000.0

    key = jax.random.PRNGKey(0)
    kx, kw = jax.random.split(key)

    # Deterministic synthetic params: weights ~ U[0,1) * width, shape (num_dim, embed_dim).
    weights = jax.random.uniform(kw, (num_dim, embed_dim), dtype=jnp.float32) * width
    # Example input: (batch, embed_dim).
    x = jax.random.uniform(kx, (batch, embed_dim), dtype=jnp.float32)

    v = lsh_forward(x, weights)
    v = jax.block_until_ready(v)

    # Reference check in plain JAX (same trunc-toward-zero semantics).
    v_ref = jnp.trunc(x @ weights.T).astype(jnp.int32)
    assert v.shape == (batch, num_dim) and v.dtype == jnp.int32
    assert bool(jnp.all(v == v_ref))

    print("KERNEL_OK")
</pallas_src>

<mosaic_0001>
module attributes {stable_mosaic.version = 11 : i64} {
  func.func @lsh_kernel(%arg0: i32, %arg1: memref<8x32xf32, #tpu.memory_space<vmem>>, %arg2: memref<32x4xf32, #tpu.memory_space<vmem>>, %arg3: memref<8x4xi32, #tpu.memory_space<vmem>>) attributes {dimension_semantics = [#tpu.dimension_semantics<parallel>], iteration_bounds = array<i64: 1>, scalar_prefetch = 0 : i64, scratch_operands = 0 : i64, tpu.core_type = #tpu.core_type<tc>, window_params = [{transform_indices = @transform_0, window_bounds = array<i64: 8, 32>}, {pipeline_mode = #tpu.pipeline_mode<synchronous>, transform_indices = @transform_1, window_bounds = array<i64: 32, 4>}, {transform_indices = @transform_2, window_bounds = array<i64: 8, 4>}]} {
    %c0 = arith.constant 0 : index
    %c0_0 = arith.constant 0 : index
    %0 = vector.load %arg1[%c0, %c0_0] : memref<8x32xf32, #tpu.memory_space<vmem>>, vector<8x32xf32>
    %c0_1 = arith.constant 0 : index
    %c0_2 = arith.constant 0 : index
    %1 = vector.load %arg2[%c0_1, %c0_2] : memref<32x4xf32, #tpu.memory_space<vmem>>, vector<32x4xf32>
    %cst = arith.constant dense<0.000000e+00> : vector<8x4xf32>
    %2 = tpu.matmul %0, %1, %cst {dimension_numbers = #tpu.dot_dimension_numbers<[1], [0], [0], [1], [0, 0, 1, 1], [], []>} : vector<8x32xf32>, vector<32x4xf32>, vector<8x4xf32> -> vector<8x4xf32>
    %3 = arith.fptosi %2 : vector<8x4xf32> to vector<8x4xi32>
    %c0_3 = arith.constant 0 : index
    %c0_4 = arith.constant 0 : index
    %4 = vector.load %arg3[%c0_3, %c0_4] : memref<8x4xi32, #tpu.memory_space<vmem>>, vector<8x4xi32>
    tpu.vector_store %arg3[%c0_3, %c0_4], %3 {strides = array<i32>} : memref<8x4xi32, #tpu.memory_space<vmem>>, vector<8x4xi32>,
    return
  }
  func.func @transform_0(%arg0: i32) -> (i32, i32) {
    %c0_i32 = arith.constant 0 : i32
    %c0_i32_0 = arith.constant 0 : i32
    return %arg0, %c0_i32 : i32, i32
  }
  func.func @transform_1(%arg0: i32) -> (i32, i32) {
    %c0_i32 = arith.constant 0 : i32
    %c0_i32_0 = arith.constant 0 : i32
    %c0_i32_1 = arith.constant 0 : i32
    return %c0_i32, %c0_i32_0 : i32, i32
  }
  func.func @transform_2(%arg0: i32) -> (i32, i32) {
    %c0_i32 = arith.constant 0 : i32
    %c0_i32_0 = arith.constant 0 : i32
    return %arg0, %c0_i32 : i32, i32
  }
}

</mosaic_0001>

<llo_original>
// kernel: tpu_custom_call.1
$region0: #{tpu_custom_call.1}
  #allocation0 [shape = 'u32[]', space=smem, size = 0x4, offset = 0x4, fixed_abs, tag = 'smem constant byte address 0x4 - core index']
  #allocation1 [shape = 'u32[72,128]{1,0:T(1,128)}', space=vmem, size = 0x9000, scoped, tag = 'internal scratch']
  %s0 = inlined_call_operand.vmem [shape: f32[8,32], index: 0, kind: input, shape index: {}]
  %s1 = inlined_call_operand.vmem [shape: f32[32,4], index: 1, kind: input, shape index: {}]
  %s2 = inlined_call_operand.vmem [shape: s32[8,4], index: 2, kind: output, shape index: {}]
  %s3 = sld [smem:[#allocation0]]
  $region18: #{tpu_custom_call.1} parent=0
    _
  %s5 = ssub.s32 1, %s3
  %s6 = scalar_select 0, %s5, %s3
  // Predicated region
  $region2: #{tpu_custom_call.1} parent=0 // pred_check
    _
  $region3: #{tpu_custom_call.1} parent=0 // pred_check_branch
    %8 = sbr.rel (0) target = $region5
  $region4: #{tpu_custom_call.1} parent=0 // pred_region
    _
  $region5: #{tpu_custom_call.1} parent=0 // pred_fallthru
    _
  // Predicated region
  $region6: #{tpu_custom_call.1} parent=0 // pred_check
    _
  $region7: #{tpu_custom_call.1} parent=0 // pred_check_branch
    %10 = sbr.rel (0) target = $region9
  $region8: #{tpu_custom_call.1} parent=0 // pred_region
    _
  $region9: #{tpu_custom_call.1} parent=0 // pred_fallthru
    _
  %v11 = vld [vmem:[%s0] sm:$0xff]
  %v12 = vld [vmem:[%s1] sm:$0xff]
  %v13 = vld [vmem:[%s1 + $0x8] sm:$0xff]
  %v14 = vld [vmem:[%s1 + $0x10] sm:$0xff]
  %v15 = vld [vmem:[%s1 + $0x18] sm:$0xff]
  %vm16 = vcmask 261120
  %v18 = vsel %vm16, %v11, 0
  %20 = vmatpush.msra.mxu0 0.0
  %21 = vmatpush.msra.mxu0 0.0
  %22 = vmatpush.msra.mxu0 0.0
  %23 = vmatpush.msra.mxu0 0.0
  %24 = vmatpush.msra.mxu0 0.0
  %25 = vmatpush.msra.mxu0 0.0
  %26 = vmatpush.msra.mxu0 0.0
  %27 = vmatpush.msra.mxu0 0.0
  %28 = vmatpush.msra.mxu0 0.0
  %29 = vmatpush.msra.mxu0 0.0
  %30 = vmatpush.msra.mxu0 0.0
  %31 = vmatpush.msra.mxu0 0.0
  %32 = vmatpush.msra.mxu0 %v15
  %33 = vmatpush.msra.mxu0 %v14
  %34 = vmatpush.msra.mxu0 %v13
  %35 = vmatpush.msra.mxu0 %v12
  %36 = vmatmul.f32.gmra.mxu0 %v18
  %v37 = vpop.f32.mrf.mxu0
  %v38 = vadd.f32 0.0, %v37
  %39 = vdwg.mxu0
  %v40 = vcvt.f32.s32.to.zero.pseudo %v38
  %vm41 = vcmask 31744
  %42 = vst.msk [vmem:[%s2] sm:$0xff] %vm41, %v40
  // Predicated region
  $region10: #{tpu_custom_call.1} parent=0 // pred_check
    _
  $region11: #{tpu_custom_call.1} parent=0 // pred_check_branch
    %44 = sbr.rel (0) target = $region13
  $region12: #{tpu_custom_call.1} parent=0 // pred_region
    _
  $region13: #{tpu_custom_call.1} parent=0 // pred_fallthru
    _
  // Predicated region
  $region14: #{tpu_custom_call.1} parent=0 // pred_check
    _
  $region15: #{tpu_custom_call.1} parent=0 // pred_check_branch
    %46 = sbr.rel (0) target = $region17
  $region16: #{tpu_custom_call.1} parent=0 // pred_region
    _
  $region17: #{tpu_custom_call.1} parent=0 // pred_fallthru
    _

</llo_original>
